<compile_context>
chip_gen: v7x
topology: tpu7x:2x2x1
jax: 0.10.0
libtpu: 0.0.40
codegen_flags: <defaults>
</compile_context>

<pallas_src>
import math

import jax
import jax.numpy as jnp
from jax import lax
from jax.experimental import pallas as pl
from jax.experimental.pallas import tpu as pltpu

_LANES = 128
_EPS = 1e-30  # clamp ||u||^2; keeps padded / degenerate rows finite


def _kernel_const_ez(x_ref, c_ref, o_ref):
    # x_ref: (3, TR, 128), c_ref: (2, TR, 128), o_ref: (3, TR, 128)
    x0 = x_ref[0].astype(jnp.float32)
    x1 = x_ref[1].astype(jnp.float32)
    x2 = x_ref[2].astype(jnp.float32)
    c0 = c_ref[0].astype(jnp.float32)
    c1 = c_ref[1].astype(jnp.float32)

    # Constant normal field n = e_z: d = <n, x> = x2, u = n - d * x.
    u0 = -(x2 * x0)
    u1 = -(x2 * x1)
    u2 = 1.0 - x2 * x2

    inv = lax.rsqrt(jnp.maximum(u0 * u0 + u1 * u1 + u2 * u2, _EPS))
    e10, e11, e12 = u0 * inv, u1 * inv, u2 * inv

    # e2 = x x e1
    e20 = x1 * e12 - x2 * e11
    e21 = x2 * e10 - x0 * e12
    e22 = x0 * e11 - x1 * e10

    o_ref[0] = (c0 * e10 + c1 * e20).astype(o_ref.dtype)
    o_ref[1] = (c0 * e11 + c1 * e21).astype(o_ref.dtype)
    o_ref[2] = (c0 * e12 + c1 * e22).astype(o_ref.dtype)


def _kernel_with_n(x_ref, n_ref, c_ref, o_ref):
    # x_ref, n_ref: (3, TR, 128), c_ref: (2, TR, 128), o_ref: (3, TR, 128)
    x0 = x_ref[0].astype(jnp.float32)
    x1 = x_ref[1].astype(jnp.float32)
    x2 = x_ref[2].astype(jnp.float32)
    n0 = n_ref[0].astype(jnp.float32)
    n1 = n_ref[1].astype(jnp.float32)
    n2 = n_ref[2].astype(jnp.float32)
    c0 = c_ref[0].astype(jnp.float32)
    c1 = c_ref[1].astype(jnp.float32)

    # Gram-Schmidt: project the normal field onto the tangent plane at x.
    d = n0 * x0 + n1 * x1 + n2 * x2
    u0 = n0 - d * x0
    u1 = n1 - d * x1
    u2 = n2 - d * x2

    inv = lax.rsqrt(jnp.maximum(u0 * u0 + u1 * u1 + u2 * u2, _EPS))
    e10, e11, e12 = u0 * inv, u1 * inv, u2 * inv

    e20 = x1 * e12 - x2 * e11
    e21 = x2 * e10 - x0 * e12
    e22 = x0 * e11 - x1 * e10

    o_ref[0] = (c0 * e10 + c1 * e20).astype(o_ref.dtype)
    o_ref[1] = (c0 * e11 + c1 * e21).astype(o_ref.dtype)
    o_ref[2] = (c0 * e12 + c1 * e22).astype(o_ref.dtype)


def _pick_block_rows(rows, block_rows):
    """Choose TR (multiple of 8) rows of 128 points per grid step."""
    tr = min(block_rows, ((rows + 7) // 8) * 8)
    tr = max(8, ((tr + 7) // 8) * 8)
    # Prefer >= 2 grid steps when possible so v7x's 2 TensorCores can split
    # the ("parallel",) grid axis; free on v5e/v6e (single TC).
    if pl.cdiv(rows, tr) == 1 and tr > 8:
        tr = max(8, ((tr // 2 + 7) // 8) * 8)
    return tr


def _to_feature_major(a2d, pad, rows_pad):
    """[m, C] -> padded feature-major [C, rows_pad, 128] with minimal passes."""
    if pad:
        a2d = jnp.pad(a2d, ((0, pad), (0, 0)))
    return a2d.T.reshape(a2d.shape[1], rows_pad, _LANES)


def project_to_tangent_intrinsic(x, coeff, get_normal_vector=None, block_rows=512):
    """x: [..., 3] points on S^2; coeff: [..., 2]; returns [..., 3] tangent vectors."""
    assert x.shape[-1] == 3 and coeff.shape[-1] == 2
    assert x.shape[:-1] == coeff.shape[:-1]

    batch_shape = x.shape[:-1]
    m = math.prod(batch_shape)
    out_dtype = x.dtype

    rows = pl.cdiv(m, _LANES)
    tr = _pick_block_rows(rows, block_rows)
    rows_pad = pl.cdiv(rows, tr) * tr
    m_pad = rows_pad * _LANES
    pad = m_pad - m

    use_const_field = get_normal_vector is None

    xf = _to_feature_major(x.reshape(m, 3), pad, rows_pad)       # [3, R, 128]
    cf = _to_feature_major(coeff.reshape(m, 2), pad, rows_pad)   # [2, R, 128]

    spec3 = pl.BlockSpec((3, tr, _LANES), lambda i: (0, i, 0))
    spec2 = pl.BlockSpec((2, tr, _LANES), lambda i: (0, i, 0))

    if use_const_field:
        # TODO(synk): exact default normal-vector field of mdgp's
        # HypersphereFrame unknown; assume the constant "north pole" field e_z
        # and compute it in-kernel (no n traffic to/from HBM).
        kernel = _kernel_const_ez
        in_specs = [spec3, spec2]
        operands = (xf, cf)
    else:
        nf = _to_feature_major(
            get_normal_vector(x).reshape(m, 3), pad, rows_pad)   # [3, R, 128]
        kernel = _kernel_with_n
        in_specs = [spec3, spec3, spec2]
        operands = (xf, nf, cf)

    out_t = pl.pallas_call(
        kernel,
        out_shape=jax.ShapeDtypeStruct((3, rows_pad, _LANES), out_dtype),
        grid_spec=pltpu.PrefetchScalarGridSpec(
            num_scalar_prefetch=0,
            grid=(rows_pad // tr,),
            in_specs=in_specs,
            out_specs=spec3,
        ),
        compiler_params=pltpu.CompilerParams(dimension_semantics=("parallel",)),
    )(*operands)

    out = out_t.reshape(3, m_pad).T[:m].reshape(*batch_shape, 3)
    return out


def _reference(x, coeff, get_normal_vector=None):
    if get_normal_vector is None:
        n = jnp.zeros_like(x).at[..., -1].set(1.0)
    else:
        n = get_normal_vector(x)
    d = jnp.sum(n * x, axis=-1, keepdims=True)
    u = n - d * x
    e1 = u / jnp.linalg.norm(u, axis=-1, keepdims=True)
    e2 = jnp.cross(x, e1)
    return coeff[..., 0:1] * e1 + coeff[..., 1:2] * e2


if __name__ == "__main__":
    key = jax.random.PRNGKey(0)
    kx, kc = jax.random.split(key)

    B, N = 2, 128  # 256 flattened points on S^2
    x = jax.random.normal(kx, (B, N, 3), dtype=jnp.float32)
    x = x / jnp.linalg.norm(x, axis=-1, keepdims=True)
    coeff = jax.random.normal(kc, (B, N, 2), dtype=jnp.float32)

    # 1) Default constant-e_z normal field (fast path, n never hits HBM).
    out = jax.block_until_ready(project_to_tangent_intrinsic(x, coeff))
    ref = _reference(x, coeff)
    assert out.shape == (B, N, 3), out.shape
    assert out.dtype == x.dtype, out.dtype
    assert bool(jnp.allclose(out, ref, atol=1e-5, rtol=1e-5)), float(
        jnp.max(jnp.abs(out - ref))
    )

    # 2) User-supplied normal-vector field path.
    def custom_field(pts):
        return jnp.broadcast_to(
            jnp.asarray([0.3, -0.5, 0.8], dtype=pts.dtype), pts.shape
        )

    out2 = jax.block_until_ready(
        project_to_tangent_intrinsic(x, coeff, get_normal_vector=custom_field)
    )
    ref2 = _reference(x, coeff, get_normal_vector=custom_field)
    assert bool(jnp.allclose(out2, ref2, atol=1e-5, rtol=1e-5)), float(
        jnp.max(jnp.abs(out2 - ref2))
    )

    print("KERNEL_OK")
</pallas_src>

<mosaic_0001>
module attributes {stable_mosaic.version = 11 : i64} {
  func.func @_kernel_const_ez(%arg0: i32, %arg1: memref<3x8x128xf32, #tpu.memory_space<vmem>>, %arg2: memref<2x8x128xf32, #tpu.memory_space<vmem>>, %arg3: memref<3x8x128xf32, #tpu.memory_space<vmem>>) attributes {dimension_semantics = [#tpu.dimension_semantics<parallel>], iteration_bounds = array<i64: 1>, scalar_prefetch = 0 : i64, scratch_operands = 0 : i64, tpu.core_type = #tpu.core_type<tc>, window_params = [{transform_indices = @transform_0, window_bounds = array<i64: 3, 8, 128>}, {transform_indices = @transform_1, window_bounds = array<i64: 2, 8, 128>}, {transform_indices = @transform_2, window_bounds = array<i64: 3, 8, 128>}]} {
    %c0 = arith.constant 0 : index
    %c0_0 = arith.constant 0 : index
    %c0_1 = arith.constant 0 : index
    %0 = vector.load %arg1[%c0, %c0_0, %c0_1] : memref<3x8x128xf32, #tpu.memory_space<vmem>>, vector<1x8x128xf32>
    %1 = vector.shape_cast %0 : vector<1x8x128xf32> to vector<8x128xf32>
    %c1 = arith.constant 1 : index
    %c0_2 = arith.constant 0 : index
    %c0_3 = arith.constant 0 : index
    %2 = vector.load %arg1[%c1, %c0_2, %c0_3] : memref<3x8x128xf32, #tpu.memory_space<vmem>>, vector<1x8x128xf32>
    %3 = vector.shape_cast %2 : vector<1x8x128xf32> to vector<8x128xf32>
    %c2 = arith.constant 2 : index
    %c0_4 = arith.constant 0 : index
    %c0_5 = arith.constant 0 : index
    %4 = vector.load %arg1[%c2, %c0_4, %c0_5] : memref<3x8x128xf32, #tpu.memory_space<vmem>>, vector<1x8x128xf32>
    %5 = vector.shape_cast %4 : vector<1x8x128xf32> to vector<8x128xf32>
    %c0_6 = arith.constant 0 : index
    %c0_7 = arith.constant 0 : index
    %c0_8 = arith.constant 0 : index
    %6 = vector.load %arg2[%c0_6, %c0_7, %c0_8] : memref<2x8x128xf32, #tpu.memory_space<vmem>>, vector<1x8x128xf32>
    %7 = vector.shape_cast %6 : vector<1x8x128xf32> to vector<8x128xf32>
    %c1_9 = arith.constant 1 : index
    %c0_10 = arith.constant 0 : index
    %c0_11 = arith.constant 0 : index
    %8 = vector.load %arg2[%c1_9, %c0_10, %c0_11] : memref<2x8x128xf32, #tpu.memory_space<vmem>>, vector<1x8x128xf32>
    %9 = vector.shape_cast %8 : vector<1x8x128xf32> to vector<8x128xf32>
    %10 = arith.mulf %5, %1 : vector<8x128xf32>
    %cst = arith.constant 0.000000e+00 : f32
    %11 = vector.broadcast %cst : f32 to vector<8x128xf32>
    %12 = arith.subf %11, %10 : vector<8x128xf32>
    %13 = arith.mulf %5, %3 : vector<8x128xf32>
    %cst_12 = arith.constant 0.000000e+00 : f32
    %14 = vector.broadcast %cst_12 : f32 to vector<8x128xf32>
    %15 = arith.subf %14, %13 : vector<8x128xf32>
    %16 = arith.mulf %5, %5 : vector<8x128xf32>
    %cst_13 = arith.constant 1.000000e+00 : f32
    %17 = vector.broadcast %cst_13 : f32 to vector<8x128xf32>
    %18 = arith.subf %17, %16 : vector<8x128xf32>
    %19 = arith.mulf %12, %12 : vector<8x128xf32>
    %20 = arith.mulf %15, %15 : vector<8x128xf32>
    %21 = arith.addf %19, %20 : vector<8x128xf32>
    %22 = arith.mulf %18, %18 : vector<8x128xf32>
    %23 = arith.addf %21, %22 : vector<8x128xf32>
    %cst_14 = arith.constant 1.000000e-30 : f32
    %24 = vector.broadcast %cst_14 : f32 to vector<8x128xf32>
    %25 = arith.maximumf %23, %24 : vector<8x128xf32>
    %26 = math.rsqrt %25 : vector<8x128xf32>
    %27 = arith.mulf %12, %26 : vector<8x128xf32>
    %28 = arith.mulf %15, %26 : vector<8x128xf32>
    %29 = arith.mulf %18, %26 : vector<8x128xf32>
    %30 = arith.mulf %3, %29 : vector<8x128xf32>
    %31 = arith.mulf %5, %28 : vector<8x128xf32>
    %32 = arith.subf %30, %31 : vector<8x128xf32>
    %33 = arith.mulf %5, %27 : vector<8x128xf32>
    %34 = arith.mulf %1, %29 : vector<8x128xf32>
    %35 = arith.subf %33, %34 : vector<8x128xf32>
    %36 = arith.mulf %1, %28 : vector<8x128xf32>
    %37 = arith.mulf %3, %27 : vector<8x128xf32>
    %38 = arith.subf %36, %37 : vector<8x128xf32>
    %39 = arith.mulf %7, %27 : vector<8x128xf32>
    %40 = arith.mulf %9, %32 : vector<8x128xf32>
    %41 = arith.addf %39, %40 : vector<8x128xf32>
    %c0_15 = arith.constant 0 : index
    %c0_16 = arith.constant 0 : index
    %c0_17 = arith.constant 0 : index
    %42 = vector.load %arg3[%c0_15, %c0_16, %c0_17] : memref<3x8x128xf32, #tpu.memory_space<vmem>>, vector<1x8x128xf32>
    %43 = vector.shape_cast %42 : vector<1x8x128xf32> to vector<8x128xf32>
    %44 = vector.shape_cast %41 : vector<8x128xf32> to vector<1x8x128xf32>
    tpu.vector_store %arg3[%c0_15, %c0_16, %c0_17], %44 {strides = array<i32>} : memref<3x8x128xf32, #tpu.memory_space<vmem>>, vector<1x8x128xf32>,
    %45 = arith.mulf %7, %28 : vector<8x128xf32>
    %46 = arith.mulf %9, %35 : vector<8x128xf32>
    %47 = arith.addf %45, %46 : vector<8x128xf32>
    %c1_18 = arith.constant 1 : index
    %c0_19 = arith.constant 0 : index
    %c0_20 = arith.constant 0 : index
    %48 = vector.load %arg3[%c1_18, %c0_19, %c0_20] : memref<3x8x128xf32, #tpu.memory_space<vmem>>, vector<1x8x128xf32>
    %49 = vector.shape_cast %48 : vector<1x8x128xf32> to vector<8x128xf32>
    %50 = vector.shape_cast %47 : vector<8x128xf32> to vector<1x8x128xf32>
    tpu.vector_store %arg3[%c1_18, %c0_19, %c0_20], %50 {strides = array<i32>} : memref<3x8x128xf32, #tpu.memory_space<vmem>>, vector<1x8x128xf32>,
    %51 = arith.mulf %7, %29 : vector<8x128xf32>
    %52 = arith.mulf %9, %38 : vector<8x128xf32>
    %53 = arith.addf %51, %52 : vector<8x128xf32>
    %c2_21 = arith.constant 2 : index
    %c0_22 = arith.constant 0 : index
    %c0_23 = arith.constant 0 : index
    %54 = vector.load %arg3[%c2_21, %c0_22, %c0_23] : memref<3x8x128xf32, #tpu.memory_space<vmem>>, vector<1x8x128xf32>
    %55 = vector.shape_cast %54 : vector<1x8x128xf32> to vector<8x128xf32>
    %56 = vector.shape_cast %53 : vector<8x128xf32> to vector<1x8x128xf32>
    tpu.vector_store %arg3[%c2_21, %c0_22, %c0_23], %56 {strides = array<i32>} : memref<3x8x128xf32, #tpu.memory_space<vmem>>, vector<1x8x128xf32>,
    return
  }
  func.func @transform_0(%arg0: i32) -> (i32, i32, i32) {
    %c0_i32 = arith.constant 0 : i32
    %c0_i32_0 = arith.constant 0 : i32
    %c0_i32_1 = arith.constant 0 : i32
    return %c0_i32, %arg0, %c0_i32_0 : i32, i32, i32
  }
  func.func @transform_1(%arg0: i32) -> (i32, i32, i32) {
    %c0_i32 = arith.constant 0 : i32
    %c0_i32_0 = arith.constant 0 : i32
    %c0_i32_1 = arith.constant 0 : i32
    return %c0_i32, %arg0, %c0_i32_0 : i32, i32, i32
  }
  func.func @transform_2(%arg0: i32) -> (i32, i32, i32) {
    %c0_i32 = arith.constant 0 : i32
    %c0_i32_0 = arith.constant 0 : i32
    %c0_i32_1 = arith.constant 0 : i32
    return %c0_i32, %arg0, %c0_i32_0 : i32, i32, i32
  }
}

</mosaic_0001>

<llo_original>
// kernel: tpu_custom_call.1
$region0: #{tpu_custom_call.1}
  #allocation0 [shape = 'u32[]', space=smem, size = 0x4, offset = 0x4, fixed_abs, tag = 'smem constant byte address 0x4 - core index']
  #allocation1 [shape = 'u32[144,128]{1,0:T(1,128)}', space=vmem, size = 0x12000, scoped, tag = 'internal scratch']
  %s0 = inlined_call_operand.hbm [shape: f32[3,8,128], index: 0, kind: input, shape index: {}]
  %s1 = inlined_call_operand.hbm [shape: f32[2,8,128], index: 1, kind: input, shape index: {}]
  %s2 = inlined_call_operand.hbm [shape: f32[3,8,128], index: 2, kind: output, shape index: {}]
  %s3 = sld [smem:[#allocation0]]
  $region26: #{tpu_custom_call.1} parent=0
    _
  %s5 = ssub.s32 1, %s3
  %s6 = scalar_select 0, %s5, %s3
  $region1: #{tpu_custom_call.1} parent=0
    #allocation2 [shape = 'u8[12288]{0}', space=vmem, size = 0x3000, scoped, tag = 'input window, operand 0, single buffered']
    #allocation3 [shape = 's32[1]{0}', space=sflag, size = 0x4, scoped, tag = 'scoped memory for tpu_custom_call.1']
    #allocation4 [shape = 's32[1]{0}', space=sflag, size = 0x4, scoped, tag = 'scoped memory for tpu_custom_call.1']
    #allocation5 [shape = 'u8[8192]{0}', space=vmem, size = 0x2000, scoped, tag = 'input window, operand 1, single buffered']
    #allocation6 [shape = 's32[1]{0}', space=sflag, size = 0x4, scoped, tag = 'scoped memory for tpu_custom_call.1']
    #allocation7 [shape = 'u8[12288]{0}', space=vmem, size = 0x3000, scoped, tag = 'output window, operand 0, single buffered']
    %7 = vsyncpa [#allocation3], 0
    %8 = vsyncpa [#allocation6], 0
    %9 = vsyncpa [#allocation4], 0
    // Predicated region
    $region2: #{tpu_custom_call.1} parent=1 // pred_check
      _
    $region3: #{tpu_custom_call.1} parent=1 // pred_check_branch
      %11 = sbr.rel (0) target = $region5
    $region4: #{tpu_custom_call.1} parent=1 // pred_region
      %s13 = ssub.s32 384, 384
      %14 = vsyncadd [#allocation3], %s13
      %s15 = sshll.u32 [#allocation2], 4
      %s16 = int_to_ptr.vmem [resolvable:$true] %s15
      %21 = dma.hbm_to_vmem [thread:$0]  %s0, 384, %s16, [#allocation3], 128, 128, 8
    $region5: #{tpu_custom_call.1} parent=1 // pred_fallthru
      _
    // Predicated region
    $region6: #{tpu_custom_call.1} parent=1 // pred_check
      _
    $region7: #{tpu_custom_call.1} parent=1 // pred_check_branch
      %23 = sbr.rel (0) target = $region9
    $region8: #{tpu_custom_call.1} parent=1 // pred_region
      %s25 = ssub.s32 256, 256
      %26 = vsyncadd [#allocation6], %s25
      %s27 = sshll.u32 [#allocation5], 4
      %s28 = int_to_ptr.vmem [resolvable:$true] %s27
      %33 = dma.hbm_to_vmem [thread:$0]  %s1, 256, %s28, [#allocation6], 128, 128, 8
    $region9: #{tpu_custom_call.1} parent=1 // pred_fallthru
      _
    // Predicated region
    $region10: #{tpu_custom_call.1} parent=1 // pred_check
      _
    $region11: #{tpu_custom_call.1} parent=1 // pred_check_branch
      %35 = sbr.rel (0) target = $region13
    $region12: #{tpu_custom_call.1} parent=1 // pred_region
      %36 = dma.done [#allocation3], 384
    $region13: #{tpu_custom_call.1} parent=1 // pred_fallthru
      _
    // Predicated region
    $region14: #{tpu_custom_call.1} parent=1 // pred_check
      _
    $region15: #{tpu_custom_call.1} parent=1 // pred_check_branch
      %38 = sbr.rel (0) target = $region17
    $region16: #{tpu_custom_call.1} parent=1 // pred_region
      %39 = dma.done [#allocation6], 256
    $region17: #{tpu_custom_call.1} parent=1 // pred_fallthru
      _
    %v40 = vld [vmem:[#allocation2] sm:$0xff]
    %s41 = scalar_lea.vmem [#allocation2], 8
    %v42 = vld [vmem:[%s41] sm:$0xff]
    %s43 = scalar_lea.vmem [#allocation2], 16
    %v44 = vld [vmem:[%s43] sm:$0xff]
    %v45 = vld [vmem:[#allocation5] sm:$0xff]
    %s46 = scalar_lea.vmem [#allocation5], 8
    %v47 = vld [vmem:[%s46] sm:$0xff]
    %v48 = vmul.f32 %v44, %v40
    %v49 = vsub.f32 0.0, %v48
    %v50 = vmul.f32 %v44, %v42
    %v51 = vsub.f32 0.0, %v50
    %v52 = vmul.f32 %v44, %v44
    %v53 = vsub.f32 1.0, %v52
    %v54 = vmul.f32 %v49, %v49
    %v55 = vmul.f32 %v51, %v51
    %v56 = vadd.f32 %v54, %v55
    %v57 = vmul.f32 %v53, %v53
    %v58 = vadd.f32 %v56, %v57
    %v59 = vmax.f32 %v58, 1e-30
    %v60 = vrsqrt.pop %v59
    %v61 = vmul.f32 %v49, %v60
    %v62 = vmul.f32 %v51, %v60
    %v63 = vmul.f32 %v53, %v60
    %v64 = vmul.f32 %v42, %v63
    %v65 = vmul.f32 %v44, %v62
    %v66 = vsub.f32 %v64, %v65
    %v67 = vmul.f32 %v44, %v61
    %v68 = vmul.f32 %v40, %v63
    %v69 = vsub.f32 %v67, %v68
    %v70 = vmul.f32 %v40, %v62
    %v71 = vmul.f32 %v42, %v61
    %v72 = vsub.f32 %v70, %v71
    %v73 = vmul.f32 %v45, %v61
    %v74 = vmul.f32 %v47, %v66
    %v75 = vadd.f32 %v73, %v74
    %76 = vst [vmem:[#allocation7] sm:$0xff] %v75
    %v77 = vmul.f32 %v45, %v62
    %v78 = vmul.f32 %v47, %v69
    %v79 = vadd.f32 %v77, %v78
    %s80 = scalar_lea.vmem [#allocation7], 8
    %81 = vst [vmem:[%s80] sm:$0xff] %v79
    %v82 = vmul.f32 %v45, %v63
    %v83 = vmul.f32 %v47, %v72
    %v84 = vadd.f32 %v82, %v83
    %s85 = scalar_lea.vmem [#allocation7], 16
    %86 = vst [vmem:[%s85] sm:$0xff] %v84
    // Predicated region
    $region18: #{tpu_custom_call.1} parent=1 // pred_check
      _
    $region19: #{tpu_custom_call.1} parent=1 // pred_check_branch
      %88 = sbr.rel (0) target = $region21
    $region20: #{tpu_custom_call.1} parent=1 // pred_region
      %s90 = ssub.s32 384, 384
      %91 = vsyncadd [#allocation4], %s90
      %s92 = sshll.u32 [#allocation7], 4
      %s93 = int_to_ptr.vmem [resolvable:$true] %s92
      %98 = dma.vmem_to_hbm [thread:$0]  %s93, 384, %s2, [#allocation4], 128, 128, 8
    $region21: #{tpu_custom_call.1} parent=1 // pred_fallthru
      _
    // Predicated region
    $region22: #{tpu_custom_call.1} parent=1 // pred_check
      _
    $region23: #{tpu_custom_call.1} parent=1 // pred_check_branch
      %100 = sbr.rel (0) target = $region25
    $region24: #{tpu_custom_call.1} parent=1 // pred_region
      %101 = dma.done [#allocation4], 384
    $region25: #{tpu_custom_call.1} parent=1 // pred_fallthru
      _
    %102 = vsyncpa [#allocation3], 1
    %103 = vsyncpa [#allocation6], 1
    %104 = vsyncpa [#allocation4], 1

</llo_original>
